<compile_context>
chip_gen: v7x
topology: tpu7x:2x2x1
jax: 0.10.0
libtpu: 0.0.40
codegen_flags: <defaults>
</compile_context>

<pallas_src>
import math
import functools

import jax
import jax.numpy as jnp
from jax.experimental import pallas as pl
from jax.experimental.pallas import tpu as pltpu


def _cdiv(a, b):
    return -(-a // b)


def _decomp_kernel(wb_ref, x_ref, res_ref, mean_ref, xpad_ref, *,
                   kernels, fronts, ends, pad_base, max_end):
    """One grid step handles one (L, Ct) lane-dense tile.

    wb_ref   : SMEM (2, K)  row 0 = Linear(1, K) weights, row 1 = biases
    x_ref    : VMEM (L, Ct) input tile (time on sublanes, batch*chan on lanes)
    res_ref  : VMEM (L, Ct) output: x - moving_mean
    mean_ref : VMEM (L, Ct) output: moving_mean
    xpad_ref : VMEM (pad_base + L + max_end, Ct) scratch (input dtype) holding
               the replication-padded series; x starts at sublane offset
               pad_base (= max_front rounded up to 8 for an aligned store).
    """
    L, Nb = x_ref.shape
    K = len(kernels)

    xr = x_ref[...]                          # input dtype (read x exactly once)
    xf = xr.astype(jnp.float32)              # f32 compute copy

    # --- in-kernel replication padding (no HBM round trip).
    if pad_base > 0:
        xpad_ref[0:pad_base, :] = jnp.broadcast_to(xr[0:1, :], (pad_base, Nb))
    xpad_ref[pad_base:pad_base + L, :] = xr
    if max_end > 0:
        xpad_ref[pad_base + L:pad_base + L + max_end, :] = jnp.broadcast_to(
            xr[L - 1:L, :], (max_end, Nb))

    # --- mixing logits (logit_j = x * w_j + b_j), computed once and cached.
    logits = [xf * wb_ref[0, j] + wb_ref[1, j] for j in range(K)]
    m = logits[0]
    for j in range(1, K):
        m = jnp.maximum(m, logits[j])

    # --- fused pass: nested centered windows give incremental window sums
    # (total shifted loads/adds = max(k), not sum(k)); each kernel's exp() is
    # computed exactly once and feeds both the softmax denominator and the
    # weighted numerator.
    order = sorted(range(K), key=lambda i: kernels[i])
    acc = jnp.zeros((L, Nb), jnp.float32)
    num = jnp.zeros((L, Nb), jnp.float32)
    denom = jnp.zeros((L, Nb), jnp.float32)
    lo, hi = pad_base, pad_base - 1          # covered offset range (empty)
    for i in order:
        new_lo = pad_base - fronts[i]
        new_hi = pad_base + ends[i]
        for off in list(range(new_lo, lo)) + list(range(hi + 1, new_hi + 1)):
            if off == pad_base:              # aligned center slice == resident x
                acc = acc + xf
            else:
                acc = acc + xpad_ref[pl.ds(off, L), :].astype(jnp.float32)
        lo, hi = new_lo, new_hi
        e_i = jnp.exp(logits[i] - m)
        denom = denom + e_i
        num = num + acc * (e_i * (1.0 / kernels[i]))

    mean = num * pl.reciprocal(denom, approx=False)   # exact (test tol 1e-5)
    res_ref[...] = (xf - mean).astype(res_ref.dtype)
    mean_ref[...] = mean.astype(mean_ref.dtype)


def series_decomp_multi(x, weight, bias, kernels):
    """x: (B, L, C); weight: (K, 1) (torch Linear(1, K) weight); bias: (K,)."""
    B, L, C = x.shape
    K = len(kernels)
    fronts = tuple((k - 1) - (k - 1) // 2 for k in kernels)
    ends = tuple((k - 1) // 2 for k in kernels)
    max_front, max_end = max(fronts), max(ends)
    pad_base = _cdiv(max_front, 8) * 8 if max_front > 0 else 0
    lp_alloc = pad_base + L + max_end

    wb = jnp.stack([jnp.asarray(weight, jnp.float32).reshape(K),
                    jnp.asarray(bias, jnp.float32).reshape(K)], axis=0)

    # --- lane-dense re-layout: time on sublanes, batch*channel on lanes.
    N = B * C
    xt = jnp.transpose(x, (1, 0, 2)).reshape(L, N)

    # --- chip-aware VMEM budget (v7x: 64 MiB/TC, v5e/v6e: 128 MiB).
    try:
        vmem_cap = int(pltpu.get_tpu_info().vmem_capacity_bytes)
    except Exception:
        vmem_cap = 64 * 1024 * 1024              # conservative (v7x per-TC)
    vmem_limit = min(vmem_cap - 8 * 1024 * 1024, (vmem_cap * 7) // 8)
    vmem_limit = max(32 * 1024 * 1024, min(vmem_limit, 112 * 1024 * 1024))
    budget = vmem_limit // 2

    itemsize = jnp.dtype(x.dtype).itemsize
    L8 = _cdiv(L, 8) * 8
    Lp8 = _cdiv(lp_alloc, 8) * 8

    def block_bytes(ct):
        io = 2 * 3 * L8 * ct * itemsize          # dbl-buffered input + 2 outputs
        scratch = Lp8 * ct * itemsize            # replication-padded series
        live = (8 + K) * L8 * ct * 4             # xf, K logits, m, acc, num, denom, ...
        return io + scratch + live

    n128 = _cdiv(N, 128) * 128
    fitting = [ct for ct in range(128, n128 + 128, 128)
               if block_bytes(ct) <= budget] or [128]
    # Prefer >= 2 grid steps (DMA pipelining; v7x has 2 TensorCores).
    multi = [ct for ct in fitting if _cdiv(N, ct) >= 2]
    Ct = max(multi) if multi else max(fitting)

    n_blocks = _cdiv(N, Ct)
    N_pad = n_blocks * Ct
    if N_pad != N:
        xt = jnp.pad(xt, ((0, 0), (0, N_pad - N)))   # harmless zero lanes

    kernel = functools.partial(
        _decomp_kernel, kernels=tuple(int(k) for k in kernels),
        fronts=fronts, ends=ends, pad_base=pad_base, max_end=max_end)

    out_shape = (jax.ShapeDtypeStruct((L, N_pad), x.dtype),
                 jax.ShapeDtypeStruct((L, N_pad), x.dtype))

    res_p, mean_p = pl.pallas_call(
        kernel,
        out_shape=out_shape,
        grid=(n_blocks,),
        in_specs=[
            pl.BlockSpec(memory_space=pltpu.MemorySpace.SMEM),   # (2, K) scalars
            pl.BlockSpec((L, Ct), lambda j: (0, j)),
        ],
        out_specs=(
            pl.BlockSpec((L, Ct), lambda j: (0, j)),
            pl.BlockSpec((L, Ct), lambda j: (0, j)),
        ),
        scratch_shapes=[pltpu.VMEM((lp_alloc, Ct), x.dtype)],
        compiler_params=pltpu.CompilerParams(
            dimension_semantics=("parallel",),
            vmem_limit_bytes=int(vmem_limit)),
    )(wb, xt)

    # --- back to (B, L, C).
    res = res_p[:, :N].reshape(L, B, C).transpose(1, 0, 2)
    mean = mean_p[:, :N].reshape(L, B, C).transpose(1, 0, 2)
    return res, mean


def _reference(x, weight, bias, kernels):
    """Pure-JAX reference mirroring the PyTorch forward exactly."""
    B, L, C = x.shape
    w = weight.reshape(-1)   # (K,)
    b = bias.reshape(-1)     # (K,)
    mas = []
    for k in kernels:
        front = k - 1 - math.floor((k - 1) // 2)
        end = math.floor((k - 1) // 2)
        xp = jnp.concatenate(
            [jnp.repeat(x[:, 0:1, :], front, axis=1), x,
             jnp.repeat(x[:, -1:, :], end, axis=1)], axis=1)
        ma = jnp.stack([xp[:, t:t + k, :].mean(axis=1) for t in range(L)], axis=1)
        mas.append(ma)
    mm = jnp.stack(mas, axis=-1)                       # (B, L, C, K)
    logits = x[..., None] * w + b                      # (B, L, C, K)
    sw = jax.nn.softmax(logits, axis=-1)
    mean = jnp.sum(mm * sw, axis=-1)
    return x - mean, mean


if __name__ == "__main__":
    key = jax.random.PRNGKey(0)
    kx, kw, kb = jax.random.split(key, 3)

    B, L, C = 2, 16, 8
    kernels = [3, 5]
    K = len(kernels)

    x = jax.random.normal(kx, (B, L, C), dtype=jnp.float32)
    # Deterministic init for torch.nn.Linear(1, K): weight (K, 1), bias (K,)
    weight = jax.random.uniform(kw, (K, 1), jnp.float32, minval=-1.0, maxval=1.0)
    bias = jax.random.uniform(kb, (K,), jnp.float32, minval=-1.0, maxval=1.0)

    res, mean = series_decomp_multi(x, weight, bias, kernels)
    jax.block_until_ready((res, mean))

    res_ref, mean_ref = _reference(x, weight, bias, kernels)
    assert jnp.allclose(res, res_ref, atol=1e-5, rtol=1e-5)
    assert jnp.allclose(mean, mean_ref, atol=1e-5, rtol=1e-5)

    print("KERNEL_OK")
</pallas_src>

<mosaic_0001>
module attributes {stable_mosaic.version = 11 : i64} {
  func.func @_decomp_kernel(%arg0: i32, %arg1: memref<2x2xf32, #tpu.memory_space<smem>>, %arg2: memref<16x128xf32, #tpu.memory_space<vmem>>, %arg3: memref<16x128xf32, #tpu.memory_space<vmem>>, %arg4: memref<16x128xf32, #tpu.memory_space<vmem>>, %arg5: memref<26x128xf32, #tpu.memory_space<vmem>>) attributes {dimension_semantics = [#tpu.dimension_semantics<parallel>], iteration_bounds = array<i64: 1>, scalar_prefetch = 0 : i64, scratch_operands = 1 : i64, tpu.core_type = #tpu.core_type<tc>, window_params = [{transform_indices = @transform_0, window_bounds = array<i64: 2, 2>}, {transform_indices = @transform_1, window_bounds = array<i64: 16, 128>}, {transform_indices = @transform_2, window_bounds = array<i64: 16, 128>}, {transform_indices = @transform_3, window_bounds = array<i64: 16, 128>}]} {
    %c0 = arith.constant 0 : index
    %c0_0 = arith.constant 0 : index
    %0 = vector.load %arg2[%c0, %c0_0] : memref<16x128xf32, #tpu.memory_space<vmem>>, vector<16x128xf32>
    %1 = vector.extract_strided_slice %0 {offsets = [0, 0], sizes = [1, 128], strides = [1, 1]} : vector<16x128xf32> to vector<1x128xf32>
    %2 = vector.shape_cast %1 : vector<1x128xf32> to vector<1x128xf32>
    %3 = vector.broadcast %2 : vector<1x128xf32> to vector<8x128xf32>
    %c0_1 = arith.constant 0 : index
    %c0_2 = arith.constant 0 : index
    %4 = vector.load %arg5[%c0_1, %c0_2] : memref<26x128xf32, #tpu.memory_space<vmem>>, vector<8x128xf32>
    tpu.vector_store %arg5[%c0_1, %c0_2], %3 {strides = array<i32>} : memref<26x128xf32, #tpu.memory_space<vmem>>, vector<8x128xf32>,
    %c8 = arith.constant 8 : index
    %c0_3 = arith.constant 0 : index
    %5 = vector.load %arg5[%c8, %c0_3] : memref<26x128xf32, #tpu.memory_space<vmem>>, vector<16x128xf32>
    tpu.vector_store %arg5[%c8, %c0_3], %0 {strides = array<i32>} : memref<26x128xf32, #tpu.memory_space<vmem>>, vector<16x128xf32>,
    %6 = vector.extract_strided_slice %0 {offsets = [15, 0], sizes = [1, 128], strides = [1, 1]} : vector<16x128xf32> to vector<1x128xf32>
    %7 = vector.shape_cast %6 : vector<1x128xf32> to vector<1x128xf32>
    %8 = vector.broadcast %7 : vector<1x128xf32> to vector<2x128xf32>
    %c24 = arith.constant 24 : index
    %c0_4 = arith.constant 0 : index
    %9 = vector.load %arg5[%c24, %c0_4] : memref<26x128xf32, #tpu.memory_space<vmem>>, vector<2x128xf32>
    tpu.vector_store %arg5[%c24, %c0_4], %8 {strides = array<i32>} : memref<26x128xf32, #tpu.memory_space<vmem>>, vector<2x128xf32>,
    %c0_5 = arith.constant 0 : index
    %c0_6 = arith.constant 0 : index
    %10 = memref.load %arg1[%c0_5, %c0_6] : memref<2x2xf32, #tpu.memory_space<smem>>
    %11 = vector.broadcast %10 : f32 to vector<16x128xf32>
    %12 = arith.mulf %0, %11 : vector<16x128xf32>
    %c1 = arith.constant 1 : index
    %c0_7 = arith.constant 0 : index
    %13 = memref.load %arg1[%c1, %c0_7] : memref<2x2xf32, #tpu.memory_space<smem>>
    %14 = vector.broadcast %13 : f32 to vector<16x128xf32>
    %15 = arith.addf %12, %14 : vector<16x128xf32>
    %c0_8 = arith.constant 0 : index
    %c1_9 = arith.constant 1 : index
    %16 = memref.load %arg1[%c0_8, %c1_9] : memref<2x2xf32, #tpu.memory_space<smem>>
    %17 = vector.broadcast %16 : f32 to vector<16x128xf32>
    %18 = arith.mulf %0, %17 : vector<16x128xf32>
    %c1_10 = arith.constant 1 : index
    %c1_11 = arith.constant 1 : index
    %19 = memref.load %arg1[%c1_10, %c1_11] : memref<2x2xf32, #tpu.memory_space<smem>>
    %20 = vector.broadcast %19 : f32 to vector<16x128xf32>
    %21 = arith.addf %18, %20 : vector<16x128xf32>
    %22 = arith.maximumf %15, %21 : vector<16x128xf32>
    %cst = arith.constant 0.000000e+00 : f32
    %23 = vector.broadcast %cst : f32 to vector<16x128xf32>
    %cst_12 = arith.constant 0.000000e+00 : f32
    %24 = vector.broadcast %cst_12 : f32 to vector<16x128xf32>
    %cst_13 = arith.constant 0.000000e+00 : f32
    %25 = vector.broadcast %cst_13 : f32 to vector<16x128xf32>
    %c7 = arith.constant 7 : index
    %c0_14 = arith.constant 0 : index
    %26 = vector.load %arg5[%c7, %c0_14] : memref<26x128xf32, #tpu.memory_space<vmem>>, vector<16x128xf32>
    %27 = arith.addf %23, %26 : vector<16x128xf32>
    %28 = arith.addf %27, %0 : vector<16x128xf32>
    %c9 = arith.constant 9 : index
    %c0_15 = arith.constant 0 : index
    %29 = vector.load %arg5[%c9, %c0_15] : memref<26x128xf32, #tpu.memory_space<vmem>>, vector<16x128xf32>
    %30 = arith.addf %28, %29 : vector<16x128xf32>
    %31 = arith.subf %15, %22 : vector<16x128xf32>
    %32 = math.exp %31 : vector<16x128xf32>
    %33 = arith.addf %25, %32 : vector<16x128xf32>
    %cst_16 = arith.constant 0.333333343 : f32
    %34 = vector.broadcast %cst_16 : f32 to vector<16x128xf32>
    %35 = arith.mulf %32, %34 : vector<16x128xf32>
    %36 = arith.mulf %30, %35 : vector<16x128xf32>
    %37 = arith.addf %24, %36 : vector<16x128xf32>
    %c6 = arith.constant 6 : index
    %c0_17 = arith.constant 0 : index
    %38 = vector.load %arg5[%c6, %c0_17] : memref<26x128xf32, #tpu.memory_space<vmem>>, vector<16x128xf32>
    %39 = arith.addf %30, %38 : vector<16x128xf32>
    %c10 = arith.constant 10 : index
    %c0_18 = arith.constant 0 : index
    %40 = vector.load %arg5[%c10, %c0_18] : memref<26x128xf32, #tpu.memory_space<vmem>>, vector<16x128xf32>
    %41 = arith.addf %39, %40 : vector<16x128xf32>
    %42 = arith.subf %21, %22 : vector<16x128xf32>
    %43 = math.exp %42 : vector<16x128xf32>
    %44 = arith.addf %33, %43 : vector<16x128xf32>
    %cst_19 = arith.constant 2.000000e-01 : f32
    %45 = vector.broadcast %cst_19 : f32 to vector<16x128xf32>
    %46 = arith.mulf %43, %45 : vector<16x128xf32>
    %47 = arith.mulf %41, %46 : vector<16x128xf32>
    %48 = arith.addf %37, %47 : vector<16x128xf32>
    %49 = tpu.reciprocal %44 : vector<16x128xf32> -> vector<16x128xf32>
    %50 = arith.mulf %48, %49 : vector<16x128xf32>
    %51 = arith.subf %0, %50 : vector<16x128xf32>
    %c0_20 = arith.constant 0 : index
    %c0_21 = arith.constant 0 : index
    %52 = vector.load %arg3[%c0_20, %c0_21] : memref<16x128xf32, #tpu.memory_space<vmem>>, vector<16x128xf32>
    tpu.vector_store %arg3[%c0_20, %c0_21], %51 {strides = array<i32>} : memref<16x128xf32, #tpu.memory_space<vmem>>, vector<16x128xf32>,
    %c0_22 = arith.constant 0 : index
    %c0_23 = arith.constant 0 : index
    %53 = vector.load %arg4[%c0_22, %c0_23] : memref<16x128xf32, #tpu.memory_space<vmem>>, vector<16x128xf32>
    tpu.vector_store %arg4[%c0_22, %c0_23], %50 {strides = array<i32>} : memref<16x128xf32, #tpu.memory_space<vmem>>, vector<16x128xf32>,
    return
  }
  func.func @transform_0(%arg0: i32) -> (i32, i32) {
    %c0_i32 = arith.constant 0 : i32
    %c0_i32_0 = arith.constant 0 : i32
    %c0_i32_1 = arith.constant 0 : i32
    return %c0_i32, %c0_i32_0 : i32, i32
  }
  func.func @transform_1(%arg0: i32) -> (i32, i32) {
    %c0_i32 = arith.constant 0 : i32
    %c0_i32_0 = arith.constant 0 : i32
    return %c0_i32, %arg0 : i32, i32
  }
  func.func @transform_2(%arg0: i32) -> (i32, i32) {
    %c0_i32 = arith.constant 0 : i32
    %c0_i32_0 = arith.constant 0 : i32
    return %c0_i32, %arg0 : i32, i32
  }
  func.func @transform_3(%arg0: i32) -> (i32, i32) {
    %c0_i32 = arith.constant 0 : i32
    %c0_i32_0 = arith.constant 0 : i32
    return %c0_i32, %arg0 : i32, i32
  }
}

</mosaic_0001>

<llo_original>
// kernel: tpu_custom_call.1
$region0: #{tpu_custom_call.1}
  #allocation0 [shape = 'u32[]', space=smem, size = 0x4, offset = 0x4, fixed_abs, tag = 'smem constant byte address 0x4 - core index']
  #allocation1 [shape = 'u32[144,128]{1,0:T(1,128)}', space=vmem, size = 0x12000, scoped, tag = 'internal scratch']
  #allocation2 [shape = 'f32[26,128]{1,0:T(8,128)}', space=vmem, size = 0x4000, scoped, tag = 'scratch operand']
  %s0 = inlined_call_operand.hbm [shape: f32[2,2], index: 0, kind: input, shape index: {}]
  %s1 = inlined_call_operand.hbm [shape: f32[16,128], index: 1, kind: input, shape index: {}]
  %s2 = inlined_call_operand.hbm [shape: f32[16,128], index: 2, kind: output, shape index: {0}]
  %s3 = inlined_call_operand.hbm [shape: f32[16,128], index: 3, kind: output, shape index: {1}]
  %4 = xla_tuple %s2, %s3
  %s5 = sld [smem:[#allocation0]]
  $region34: #{tpu_custom_call.1} parent=0
    _
  %s7 = ssub.s32 1, %s5
  %s8 = scalar_select 0, %s7, %s5
  $region1: #{tpu_custom_call.1} parent=0
    #allocation3 [shape = 'u8[1024]{0}', space=smem, size = 0x400, scoped, tag = 'input window, operand 0, single buffered']
    #allocation4 [shape = 's32[1]{0}', space=sflag, size = 0x4, scoped, tag = 'scoped memory for tpu_custom_call.1']
    #allocation5 [shape = 's32[1]{0}', space=sflag, size = 0x4, scoped, tag = 'scoped memory for tpu_custom_call.1']
    #allocation6 [shape = 's32[1]{0}', space=sflag, size = 0x4, scoped, tag = 'scoped memory for tpu_custom_call.1']
    #allocation7 [shape = 'u8[8192]{0}', space=vmem, size = 0x2000, scoped, tag = 'input window, operand 1, single buffered']
    #allocation8 [shape = 'u8[8192]{0}', space=vmem, size = 0x2000, scoped, tag = 'output window, operand 0, single buffered']
    #allocation9 [shape = 'u8[8192]{0}', space=vmem, size = 0x2000, scoped, tag = 'output window, operand 1, single buffered']
    #allocation10 [shape = 's32[1]{0}', space=sflag, size = 0x4, scoped, tag = 'scoped memory for tpu_custom_call.1']
    %9 = vsyncpa [#allocation6], 0
    %10 = vsyncpa [#allocation4], 0
    %11 = vsyncpa [#allocation5], 0
    %12 = vsyncpa [#allocation10], 0
    // Predicated region
    $region2: #{tpu_custom_call.1} parent=1 // pred_check
      _
    $region3: #{tpu_custom_call.1} parent=1 // pred_check_branch
      %14 = sbr.rel (0) target = $region5
    $region4: #{tpu_custom_call.1} parent=1 // pred_region
      %s16 = ssub.s32 32, 32
      %17 = vsyncadd [#allocation6], %s16
      %20 = dma.hbm_to_smem %s0, 32, [#allocation3], [#allocation6]
    $region5: #{tpu_custom_call.1} parent=1 // pred_fallthru
      _
    // Predicated region
    $region6: #{tpu_custom_call.1} parent=1 // pred_check
      _
    $region7: #{tpu_custom_call.1} parent=1 // pred_check_branch
      %22 = sbr.rel (0) target = $region9
    $region8: #{tpu_custom_call.1} parent=1 // pred_region
      %s24 = ssub.s32 256, 256
      %25 = vsyncadd [#allocation4], %s24
      %s26 = sshll.u32 [#allocation7], 4
      %s27 = int_to_ptr.vmem [resolvable:$true] %s26
      %32 = dma.hbm_to_vmem [thread:$0]  %s1, 256, %s27, [#allocation4], 128, 128, 8
    $region9: #{tpu_custom_call.1} parent=1 // pred_fallthru
      _
    // Predicated region
    $region10: #{tpu_custom_call.1} parent=1 // pred_check
      _
    $region11: #{tpu_custom_call.1} parent=1 // pred_check_branch
      %34 = sbr.rel (0) target = $region13
    $region12: #{tpu_custom_call.1} parent=1 // pred_region
      %35 = dma.done [#allocation6], 32
    $region13: #{tpu_custom_call.1} parent=1 // pred_fallthru
      _
    // Predicated region
    $region14: #{tpu_custom_call.1} parent=1 // pred_check
      _
    $region15: #{tpu_custom_call.1} parent=1 // pred_check_branch
      %37 = sbr.rel (0) target = $region17
    $region16: #{tpu_custom_call.1} parent=1 // pred_region
      %38 = dma.done [#allocation4], 256
    $region17: #{tpu_custom_call.1} parent=1 // pred_fallthru
      _
    %39 = sfence
    %v40 = vld [vmem:[#allocation7] sm:$0xff]
    %v41 = vld [vmem:[#allocation7 + $0x8] sm:$0xff]
    %v42 = vlaneseq
    %v43 = vshrl.u32 %v42, 7
    %v44 = vsub.s32 0, %v43
    %v45 = vrot.slane %v40, %v44
    %46 = vst [vmem:[#allocation2] sm:$0xff] %v45
    %47 = vst [vmem:[#allocation2 + $0x8] sm:$0xff] %v40
    %48 = vst [vmem:[#allocation2 + $0x10] sm:$0xff] %v41
    %v49 = vlaneseq
    %v50 = vshrl.u32 %v49, 7
    %v51 = vsub.s32 7, %v50
    %v52 = vrot.slane %v41, %v51
    %53 = vst [vmem:[#allocation2 + $0x18] sm:$0x3] %v52
    %s54 = sld [smem:[#allocation3]]
    %v55 = vstv %s54
    %v56 = vmul.f32 %v40, %v55
    %v57 = vmul.f32 %v41, %v55
    %s58 = sld [smem:[#allocation3 + $0x80]]
    %v59 = vstv %s58
    %v60 = vadd.f32 %v56, %v59
    %v61 = vadd.f32 %v57, %v59
    %s62 = sld [smem:[#allocation3 + $0x1]]
    %v63 = vstv %s62
    %v64 = vmul.f32 %v40, %v63
    %v65 = vmul.f32 %v41, %v63
    %s66 = sld [smem:[#allocation3 + $0x81]]
    %v67 = vstv %s66
    %v68 = vadd.f32 %v64, %v67
    %v69 = vadd.f32 %v65, %v67
    %v70 = vmax.f32 %v60, %v68
    %v71 = vmax.f32 %v61, %v69
    %v72 = vld [vmem:[#allocation2 + $0x7] sm:$0xff]
    %v73 = vld [vmem:[#allocation2 + $0xf] sm:$0xff]
    %v74 = vadd.f32 %v72, 0.0
    %v75 = vadd.f32 %v73, 0.0
    %v76 = vadd.f32 %v74, %v40
    %v77 = vadd.f32 %v75, %v41
    %v78 = vld [vmem:[#allocation2 + $0x9] sm:$0xff]
    %v79 = vld [vmem:[#allocation2 + $0x11] sm:$0xff]
    %v80 = vadd.f32 %v76, %v78
    %v81 = vadd.f32 %v77, %v79
    %v82 = vsub.f32 %v60, %v70
    %v83 = vsub.f32 %v61, %v71
    %v84 = vmul.f32 %v82, 1.442695
    %v85 = vpow.pop %v84
    %v86 = vmul.f32 %v83, 1.442695
    %v87 = vpow.pop %v86
    %v88 = vadd.f32 %v85, 0.0
    %v89 = vadd.f32 %v87, 0.0
    %v90 = vmul.f32 %v85, 0.33333334
    %v91 = vmul.f32 %v87, 0.33333334
    %v92 = vmul.f32 %v80, %v90
    %v93 = vmul.f32 %v81, %v91
    %v94 = vadd.f32 %v92, 0.0
    %v95 = vadd.f32 %v93, 0.0
    %v96 = vld [vmem:[#allocation2 + $0x6] sm:$0xff]
    %v97 = vld [vmem:[#allocation2 + $0xe] sm:$0xff]
    %v98 = vadd.f32 %v80, %v96
    %v99 = vadd.f32 %v81, %v97
    %v100 = vld [vmem:[#allocation2 + $0xa] sm:$0xff]
    %v101 = vld [vmem:[#allocation2 + $0x12] sm:$0xff]
    %v102 = vadd.f32 %v98, %v100
    %v103 = vadd.f32 %v99, %v101
    %v104 = vsub.f32 %v68, %v70
    %v105 = vsub.f32 %v69, %v71
    %v106 = vmul.f32 %v104, 1.442695
    %v107 = vpow.pop %v106
    %v108 = vmul.f32 %v105, 1.442695
    %v109 = vpow.pop %v108
    %v110 = vadd.f32 %v88, %v107
    %v111 = vadd.f32 %v89, %v109
    %v112 = vmul.f32 %v107, 0.2
    %v113 = vmul.f32 %v109, 0.2
    %v114 = vmul.f32 %v102, %v112
    %v115 = vmul.f32 %v103, %v113
    %v116 = vadd.f32 %v94, %v114
    %v117 = vadd.f32 %v95, %v115
    %v118 = vrcp.pop %v110
    %v119 = vrcp.pop %v111
    %v120 = vmul.f32 %v116, %v118
    %v121 = vmul.f32 %v117, %v119
    %v122 = vsub.f32 %v40, %v120
    %v123 = vsub.f32 %v41, %v121
    %124 = vst [vmem:[#allocation8] sm:$0xff] %v122
    %125 = vst [vmem:[#allocation8 + $0x8] sm:$0xff] %v123
    %126 = vst [vmem:[#allocation9] sm:$0xff] %v120
    %127 = vst [vmem:[#allocation9 + $0x8] sm:$0xff] %v121
    // Predicated region
    $region18: #{tpu_custom_call.1} parent=1 // pred_check
      _
    $region19: #{tpu_custom_call.1} parent=1 // pred_check_branch
      %129 = sbr.rel (0) target = $region21
    $region20: #{tpu_custom_call.1} parent=1 // pred_region
      %s131 = ssub.s32 256, 256
      %132 = vsyncadd [#allocation5], %s131
      %s133 = sshll.u32 [#allocation8], 4
      %s134 = int_to_ptr.vmem [resolvable:$true] %s133
      %139 = dma.vmem_to_hbm [thread:$0]  %s134, 256, %s2, [#allocation5], 128, 128, 8
    $region21: #{tpu_custom_call.1} parent=1 // pred_fallthru
      _
    // Predicated region
    $region22: #{tpu_custom_call.1} parent=1 // pred_check
      _
    $region23: #{tpu_custom_call.1} parent=1 // pred_check_branch
      %141 = sbr.rel (0) target = $region25
    $region24: #{tpu_custom_call.1} parent=1 // pred_region
      %s143 = ssub.s32 256, 256
      %144 = vsyncadd [#allocation10], %s143
      %s145 = sshll.u32 [#allocation9], 4
      %s146 = int_to_ptr.vmem [resolvable:$true] %s145
      %151 = dma.vmem_to_hbm [thread:$0]  %s146, 256, %s3, [#allocation10], 128, 128, 8
    $region25: #{tpu_custom_call.1} parent=1 // pred_fallthru
      _
    // Predicated region
    $region26: #{tpu_custom_call.1} parent=1 // pred_check
      _
    $region27: #{tpu_custom_call.1} parent=1 // pred_check_branch
      %153 = sbr.rel (0) target = $region29
    $region28: #{tpu_custom_call.1} parent=1 // pred_region
      %154 = dma.done [#allocation5], 256
    $region29: #{tpu_custom_call.1} parent=1 // pred_fallthru
      _
    // Predicated region
    $region30: #{tpu_custom_call.1} parent=1 // pred_check
      _
    $region31: #{tpu_custom_call.1} parent=1 // pred_check_branch
      %156 = sbr.rel (0) target = $region33
    $region32: #{tpu_custom_call.1} parent=1 // pred_region
      %157 = dma.done [#allocation10], 256
    $region33: #{tpu_custom_call.1} parent=1 // pred_fallthru
      _
    %158 = vsyncpa [#allocation4], 1
    %159 = vsyncpa [#allocation5], 1
    %160 = vsyncpa [#allocation10], 1
    %161 = vsyncpa [#allocation6], 1

</llo_original>
